<compile_context>
chip_gen: v6e
topology: v6e:2x2x1
jax: 0.10.0
libtpu: 0.0.40
codegen_flags: <defaults>
</compile_context>

<pallas_src>
import functools

import numpy as np
import jax
import jax.numpy as jnp
from jax import lax
from jax.experimental import pallas as pl
from jax.experimental.pallas import tpu as pltpu

SIGMA = 1.0                      # sigkernel.RBFKernel(sigma) parameter
_PAIR_SUB = 8                    # sublanes per pair tile
_PAIR_LANE = 128                 # lanes per pair tile
_PAIR_TILE = _PAIR_SUB * _PAIR_LANE   # 1024 pairs -> one full (8,128) vreg per DP cell
_ROWS_PER_BLOCK_MAX = 8          # PDE rows streamed per grid step (upper bound)
_UNROLL_CELLS_MAX = 512          # fully unroll the serial loops up to this many cells/step


# ---------------------------------------------------------------------------
# Static-kernel increments (RBF Gram matrix + finite differences, fused):
#   inc[a, b, m, n] = G[m+1,n+1] + G[m,n] - G[m+1,n] - G[m,n+1]
#   G[a,b,m,n]      = exp(-||X[a,m] - Y[b,n]||^2 / SIGMA)
# Gridded over A only; one MXU call per grid step over all of B; G never touches HBM.
# ---------------------------------------------------------------------------
def _rbf_inc_kernel(x_ref, y_ref, o_ref, *, precision, B, N):
    x = x_ref[0]                                         # (M, D)
    y = y_ref[...]                                       # (B*N, D)  pre-flattened by wrapper
    xq = jnp.sum(x * x, axis=-1, keepdims=True)          # (M, 1)
    yq = jnp.sum(y * y, axis=-1)[None, :]                # (1, B*N)
    xy = lax.dot_general(x, y, (((1,), (1,)), ((), ())),
                         preferred_element_type=jnp.float32,
                         precision=precision)            # single (M,D)x(D,B*N) MXU call
    dist = jnp.maximum(xq + yq - 2.0 * xy, 0.0)          # clamp tiny negative fp error
    G = jnp.exp(-dist * (1.0 / SIGMA))                   # (M, B*N) lane-dense EUP work
    for b in range(B):                                   # cheap VPU finite differences
        Gb = G[:, b * N:(b + 1) * N]                     # (M, N) static lane slice
        o_ref[0, b] = (Gb[1:, 1:] + Gb[:-1, :-1]
                       - Gb[1:, :-1] - Gb[:-1, 1:])


def rbf_increments(X, Y, precision=lax.Precision.DEFAULT):
    A, M, D = X.shape
    B, N, _ = Y.shape
    kernel = functools.partial(_rbf_inc_kernel, precision=precision, B=B, N=N)
    # TODO(synk): emit increments directly in the PDE (rows, cols, pairs) layout to drop the
    #             plain-JAX transpose/pad glue and the masked (last-dim = N-1) stores.
    return pl.pallas_call(
        kernel,
        out_shape=jax.ShapeDtypeStruct((A, B, M - 1, N - 1), jnp.float32),
        grid=(A,),
        in_specs=[pl.BlockSpec((1, M, D), lambda a: (a, 0, 0)),
                  pl.BlockSpec((B * N, D), lambda a: (0, 0))],
        out_specs=pl.BlockSpec((1, B, M - 1, N - 1), lambda a: (a, 0, 0, 0)),
        compiler_params=pltpu.CompilerParams(dimension_semantics=("parallel",)),
    )(X.astype(jnp.float32), Y.reshape(B * N, D).astype(jnp.float32))


# ---------------------------------------------------------------------------
# Signature-kernel PDE recursion (the serial hot path of SigKernelGramMat_naive).
#
# g layout: (rows, cols, tiles*8, 128) -- PDE rows on the (arbitrary) grid axis streamed R at
# a time from HBM, PDE columns as the 2nd block dim, pairs packed onto full (8,128) vregs
# with the pair-tile axis on the (parallel) grid axis.
# Scratch row_ref (NN+1, 8, 128) persists across grid steps: current DP row K[i, :].
# ---------------------------------------------------------------------------
def _sig_pde_kernel(g_ref, o_ref, row_ref, *, naive_solver, static_unroll, rows_per_block):
    NN = g_ref.shape[1]
    i = pl.program_id(1)                                 # row-block index

    @pl.when(i == 0)
    def _():                                             # K[0, :] = 1 boundary (new pair tile)
        row_ref[...] = jnp.ones_like(row_ref)

    ones = jnp.ones((1, _PAIR_SUB, _PAIR_LANE), jnp.float32)

    def cell(e, k_left, k_diag, k01):
        # k_left = K[i+1, j], k01 = K[i, j+1], k_diag = K[i, j].
        # p/q computed inline from e: off the serial carry chain -> free filler.
        if naive_solver:
            return (k_left + k01) - k_diag * (1.0 - e)
        e2 = e * e * (1.0 / 12.0)
        return (k_left + k01) * (1.0 + 0.5 * e + e2) - k_diag * (1.0 - e2)

    for r in range(rows_per_block):                      # static: R <= 8
        if static_unroll:                                # static offsets, aligned accesses
            k_left, k_diag = ones, ones
            for j in range(NN):
                e = g_ref[r, pl.ds(j, 1)]                # (1, 8, 128) full-vreg load
                k01 = row_ref[pl.ds(j + 1, 1)]
                val = cell(e, k_left, k_diag, k01)
                row_ref[pl.ds(j + 1, 1)] = val           # K[i+1, j+1]
                k_left, k_diag = val, k01
        else:
            def body(j, carry, _r=r):
                k_left, k_diag = carry
                e = g_ref[_r, pl.ds(j, 1)]
                k01 = row_ref[pl.ds(j + 1, 1)]
                val = cell(e, k_left, k_diag, k01)
                row_ref[pl.ds(j + 1, 1)] = val
                return val, k01
            lax.fori_loop(0, NN, body, (ones, ones), unroll=8)

    @pl.when(i == pl.num_programs(1) - 1)
    def _():
        o_ref[...] = row_ref[NN]                         # K[:, :, -1, -1] for this pair tile


def _rows_per_block(NN):
    # Keep the double-buffered input block ~2 MiB: safe under v7x's 64 MiB VMEM
    # (32 MiB scoped default) while amortising per-grid-step overhead.
    budget = 2 * 1024 * 1024
    bytes_per_row = NN * _PAIR_TILE * 4
    return int(max(1, min(_ROWS_PER_BLOCK_MAX, budget // bytes_per_row)))


def _solve_pde(g, naive_solver):
    """g: (MM, NN, T*8, 128) increments, pairs packed (tile, sublane, lane).
    Returns flat (T*1024,) final K values; pair p = tile*1024 + sublane*128 + lane."""
    MM, NN, T8, L = g.shape
    assert T8 % _PAIR_SUB == 0 and L == _PAIR_LANE
    T = T8 // _PAIR_SUB
    R = _rows_per_block(NN)
    L_r = -(-MM // R) * R
    if L_r != MM:                                        # zero rows keep K == 1 (boundary)
        g = jnp.pad(g, ((L_r - MM, 0), (0, 0), (0, 0), (0, 0)))
    static_unroll = (R * NN) <= _UNROLL_CELLS_MAX
    kernel = functools.partial(_sig_pde_kernel, naive_solver=naive_solver,
                               static_unroll=static_unroll, rows_per_block=R)
    out = pl.pallas_call(
        kernel,
        out_shape=jax.ShapeDtypeStruct((T8, _PAIR_LANE), jnp.float32),
        grid=(T, L_r // R),
        in_specs=[pl.BlockSpec((R, NN, _PAIR_SUB, _PAIR_LANE),
                               lambda t, i: (i, 0, t, 0))],
        out_specs=pl.BlockSpec((_PAIR_SUB, _PAIR_LANE), lambda t, i: (t, 0)),
        scratch_shapes=[pltpu.VMEM((NN + 1, _PAIR_SUB, _PAIR_LANE), jnp.float32)],
        compiler_params=pltpu.CompilerParams(
            dimension_semantics=("parallel", "arbitrary")),
    )(g)
    return out.reshape(T8 * _PAIR_LANE)


# ---------------------------------------------------------------------------
# Plain-JAX glue: dyadic repeat, (pairs -> sublane x lane) packing, zero-prepend alignment.
# ---------------------------------------------------------------------------
def _prep_group(inc, f, L_rows, L_cols):
    """inc: (Pa, Pb, m, n) raw increments -> (L_rows, L_cols, T*8, 128), zero-prepended."""
    Pa, Pb, mm, nn = inc.shape
    if f > 1:  # torch `tile` == repeat-interleave; /f on each axis => /f**2 overall
        # TODO(synk): fold the dyadic refinement into the PDE kernel (row index_map i//f,
        #             in-kernel column repeat + scaling) to avoid the f**2 HBM blow-up.
        inc = jnp.repeat(inc, f, axis=2) / float(f)
        inc = jnp.repeat(inc, f, axis=3) / float(f)
    MMg, NNg = f * mm, f * nn
    P = Pa * Pb
    T = -(-P // _PAIR_TILE)
    g = inc.reshape(P, MMg, NNg).transpose(1, 2, 0)      # (MMg, NNg, P)
    # Zero increments keep K == 1, so prepended rows/cols just extend the unit boundary and
    # zero pair padding simply yields K == 1 in the unused slots.
    g = jnp.pad(g, ((L_rows - MMg, 0), (L_cols - NNg, 0), (0, T * _PAIR_TILE - P)))
    return g.reshape(L_rows, L_cols, T * _PAIR_SUB, _PAIR_LANE)


def _fused_sig_grams(X, Y, dyadic_order=0, naive_solver=False,
                     precision=lax.Precision.DEFAULT):
    """All three Gram matrices (XX, YY, XY) with ONE PDE kernel call."""
    A, M, _ = X.shape
    B, N, _ = Y.shape
    f = 2 ** dyadic_order
    L = f * max(M - 1, N - 1)

    inc_xx = rbf_increments(X, X, precision)             # (A, A, M-1, M-1)
    inc_yy = rbf_increments(Y, Y, precision)             # (B, B, N-1, N-1)
    inc_xy = rbf_increments(X, Y, precision)             # (A, B, M-1, N-1)

    g_xx = _prep_group(inc_xx, f, L, L)
    g_yy = _prep_group(inc_yy, f, L, L)
    g_xy = _prep_group(inc_xy, f, L, L)
    # Per-group pair tiles -> >= 3 entries on the "parallel" tile axis (both v7x cores busy).
    g = jnp.concatenate([g_xx, g_yy, g_xy], axis=2)
    out = _solve_pde(g, naive_solver)

    off_yy = (g_xx.shape[2] // _PAIR_SUB) * _PAIR_TILE
    off_xy = off_yy + (g_yy.shape[2] // _PAIR_SUB) * _PAIR_TILE
    k_xx = out[:A * A].reshape(A, A)
    k_yy = out[off_yy:off_yy + B * B].reshape(B, B)
    k_xy = out[off_xy:off_xy + A * B].reshape(A, B)
    return k_xx, k_yy, k_xy


def sig_kernel_gram(X, Y, dyadic_order=0, naive_solver=False,
                    precision=lax.Precision.DEFAULT):
    """Single Gram matrix (SigKernelGramMat_naive with an RBF static kernel)."""
    A, M, _ = X.shape
    B, N, _ = Y.shape
    f = 2 ** dyadic_order
    MM, NN = f * (M - 1), f * (N - 1)
    inc = rbf_increments(X, Y, precision)                # (A, B, M-1, N-1)
    g = _prep_group(inc, f, MM, NN)                      # (MM, NN, T*8, 128)
    out = _solve_pde(g, naive_solver)
    return out[:A * B].reshape(A, B)


def sig_mmd(X, Y, dyadic_order=0, naive_solver=False, precision=lax.Precision.DEFAULT):
    """SigMMD_naive.forward"""
    k_xx, k_yy, k_xy = _fused_sig_grams(X, Y, dyadic_order, naive_solver, precision)
    return jnp.mean(k_xx) + jnp.mean(k_yy) - 2.0 * jnp.mean(k_xy)


# ---------------------------------------------------------------------------
# Pure NumPy (float64) reference mirroring the PyTorch code, for verification.
# ---------------------------------------------------------------------------
def _ref_sig_gram(X, Y, dyadic_order=0, naive_solver=False):
    X = np.asarray(X, dtype=np.float64)
    Y = np.asarray(Y, dtype=np.float64)
    A, M, _ = X.shape
    B, N, _ = Y.shape
    dist = (np.sum(X ** 2, -1)[:, None, :, None]
            + np.sum(Y ** 2, -1)[None, :, None, :]
            - 2.0 * np.einsum('amd,bnd->abmn', X, Y))
    G = np.exp(-dist / SIGMA)
    inc = (G[:, :, 1:, 1:] + G[:, :, :-1, :-1]
           - G[:, :, 1:, :-1] - G[:, :, :-1, 1:])
    f = 2 ** dyadic_order
    inc = np.repeat(inc, f, axis=2) / float(f)
    inc = np.repeat(inc, f, axis=3) / float(f)
    MM, NN = f * (M - 1), f * (N - 1)
    K = np.zeros((A, B, MM + 1, NN + 1))
    K[:, :, 0, :] = 1.0
    K[:, :, :, 0] = 1.0
    for i in range(MM):
        for j in range(NN):
            e = inc[:, :, i, j]
            k10 = K[:, :, i + 1, j]
            k01 = K[:, :, i, j + 1]
            k00 = K[:, :, i, j]
            if naive_solver:
                K[:, :, i + 1, j + 1] = k10 + k01 + k00 * (e - 1.0)
            else:
                K[:, :, i + 1, j + 1] = ((k10 + k01) * (1.0 + 0.5 * e + e * e / 12.0)
                                         - k00 * (1.0 - e * e / 12.0))
    return K[:, :, -1, -1]


if __name__ == "__main__":
    key = jax.random.PRNGKey(0)
    kx, ky = jax.random.split(key)

    A, B, M, N, D = 2, 3, 9, 7, 4
    X = (0.1 * jax.random.normal(kx, (A, M, D))).astype(jnp.float32)
    Y = (0.1 * jax.random.normal(ky, (B, N, D))).astype(jnp.float32)

    # Full-f32 MXU precision only for the tight float64 self-check (DEFAULT is the prod default).
    prec = lax.Precision.HIGHEST

    for dyadic_order, naive_solver in ((0, False), (1, True)):
        k_xx, k_yy, k_xy = jax.block_until_ready(
            _fused_sig_grams(X, Y, dyadic_order, naive_solver, prec))
        checks = ((np.asarray(k_xx), (X, X)),
                  (np.asarray(k_yy), (Y, Y)),
                  (np.asarray(k_xy), (X, Y)))
        for got, (P, Q) in checks:
            ref = _ref_sig_gram(P, Q, dyadic_order, naive_solver)
            assert np.allclose(got, ref, rtol=1e-4, atol=1e-5), \
                (dyadic_order, naive_solver, got, ref)

    # Single-group path (no cross-group tile packing) on the dyadic/naive config.
    got_xy = np.asarray(jax.block_until_ready(sig_kernel_gram(X, Y, 1, True, prec)))
    ref_xy = _ref_sig_gram(X, Y, 1, True)
    assert np.allclose(got_xy, ref_xy, rtol=1e-4, atol=1e-5)

    mmd = jax.block_until_ready(sig_mmd(X, Y, 0, False, prec))
    mmd_ref = (np.mean(_ref_sig_gram(X, X, 0, False))
               + np.mean(_ref_sig_gram(Y, Y, 0, False))
               - 2.0 * np.mean(_ref_sig_gram(X, Y, 0, False)))
    assert np.isfinite(float(mmd))
    assert abs(float(mmd) - mmd_ref) < 1e-4, (float(mmd), mmd_ref)

    print("KERNEL_OK")
</pallas_src>

<mosaic_0001>
module attributes {stable_mosaic.version = 11 : i64} {
  func.func @_rbf_inc_kernel(%arg0: i32, %arg1: memref<1x9x4xf32, #tpu.memory_space<vmem>>, %arg2: memref<18x4xf32, #tpu.memory_space<vmem>>, %arg3: memref<1x2x8x8xf32, #tpu.memory_space<vmem>>) attributes {dimension_semantics = [#tpu.dimension_semantics<parallel>], iteration_bounds = array<i64: 2>, scalar_prefetch = 0 : i64, scratch_operands = 0 : i64, tpu.core_type = #tpu.core_type<tc>, window_params = [{transform_indices = @transform_0, window_bounds = array<i64: 1, 9, 4>}, {pipeline_mode = #tpu.pipeline_mode<synchronous>, transform_indices = @transform_1, window_bounds = array<i64: 18, 4>}, {transform_indices = @transform_2, window_bounds = array<i64: 1, 2, 8, 8>}]} {
    %c0 = arith.constant 0 : index
    %c0_0 = arith.constant 0 : index
    %c0_1 = arith.constant 0 : index
    %0 = vector.load %arg1[%c0, %c0_0, %c0_1] : memref<1x9x4xf32, #tpu.memory_space<vmem>>, vector<1x9x4xf32>
    %1 = vector.shape_cast %0 : vector<1x9x4xf32> to vector<9x4xf32>
    %c0_2 = arith.constant 0 : index
    %c0_3 = arith.constant 0 : index
    %2 = vector.load %arg2[%c0_2, %c0_3] : memref<18x4xf32, #tpu.memory_space<vmem>>, vector<18x4xf32>
    %3 = arith.mulf %1, %1 : vector<9x4xf32>
    %cst = arith.constant dense<0.000000e+00> : vector<9xf32>
    %4 = vector.multi_reduction <add>, %3, %cst [1] : vector<9x4xf32> to vector<9xf32>
    %5 = vector.shape_cast %4 : vector<9xf32> to vector<9x1xf32>
    %6 = arith.mulf %2, %2 : vector<18x4xf32>
    %cst_4 = arith.constant dense<0.000000e+00> : vector<18xf32>
    %7 = vector.multi_reduction <add>, %6, %cst_4 [1] : vector<18x4xf32> to vector<18xf32>
    %8 = vector.shape_cast %7 : vector<18xf32> to vector<1x18xf32>
    %cst_5 = arith.constant dense<0.000000e+00> : vector<9x18xf32>
    %9 = tpu.matmul %1, %2, %cst_5 {dimension_numbers = #tpu.dot_dimension_numbers<[1], [1], [0], [0], [0, 0, 1, 0], [], []>, precision = #tpu.contract_precision<fp32>} : vector<9x4xf32>, vector<18x4xf32>, vector<9x18xf32> -> vector<9x18xf32>
    %10 = vector.broadcast %5 : vector<9x1xf32> to vector<9x18xf32>
    %11 = vector.broadcast %8 : vector<1x18xf32> to vector<9x18xf32>
    %12 = arith.addf %10, %11 : vector<9x18xf32>
    %cst_6 = arith.constant 2.000000e+00 : f32
    %13 = vector.broadcast %cst_6 : f32 to vector<9x18xf32>
    %14 = arith.mulf %13, %9 : vector<9x18xf32>
    %15 = arith.subf %12, %14 : vector<9x18xf32>
    %cst_7 = arith.constant 0.000000e+00 : f32
    %16 = vector.broadcast %cst_7 : f32 to vector<9x18xf32>
    %17 = arith.maximumf %15, %16 : vector<9x18xf32>
    %cst_8 = arith.constant 0.000000e+00 : f32
    %18 = vector.broadcast %cst_8 : f32 to vector<9x18xf32>
    %19 = arith.subf %18, %17 : vector<9x18xf32>
    %cst_9 = arith.constant 1.000000e+00 : f32
    %20 = vector.broadcast %cst_9 : f32 to vector<9x18xf32>
    %21 = arith.mulf %19, %20 : vector<9x18xf32>
    %22 = math.exp %21 : vector<9x18xf32>
    %23 = vector.extract_strided_slice %22 {offsets = [0, 0], sizes = [9, 9], strides = [1, 1]} : vector<9x18xf32> to vector<9x9xf32>
    %24 = vector.extract_strided_slice %23 {offsets = [1, 1], sizes = [8, 8], strides = [1, 1]} : vector<9x9xf32> to vector<8x8xf32>
    %25 = vector.extract_strided_slice %23 {offsets = [0, 0], sizes = [8, 8], strides = [1, 1]} : vector<9x9xf32> to vector<8x8xf32>
    %26 = arith.addf %24, %25 : vector<8x8xf32>
    %27 = vector.extract_strided_slice %23 {offsets = [1, 0], sizes = [8, 8], strides = [1, 1]} : vector<9x9xf32> to vector<8x8xf32>
    %28 = arith.subf %26, %27 : vector<8x8xf32>
    %29 = vector.extract_strided_slice %23 {offsets = [0, 1], sizes = [8, 8], strides = [1, 1]} : vector<9x9xf32> to vector<8x8xf32>
    %30 = arith.subf %28, %29 : vector<8x8xf32>
    %c0_10 = arith.constant 0 : index
    %c0_11 = arith.constant 0 : index
    %c0_12 = arith.constant 0 : index
    %c0_13 = arith.constant 0 : index
    %31 = vector.load %arg3[%c0_10, %c0_11, %c0_12, %c0_13] : memref<1x2x8x8xf32, #tpu.memory_space<vmem>>, vector<1x1x8x8xf32>
    %32 = vector.shape_cast %31 : vector<1x1x8x8xf32> to vector<8x8xf32>
    %33 = vector.shape_cast %30 : vector<8x8xf32> to vector<1x1x8x8xf32>
    tpu.vector_store %arg3[%c0_10, %c0_11, %c0_12, %c0_13], %33 {strides = array<i32>} : memref<1x2x8x8xf32, #tpu.memory_space<vmem>>, vector<1x1x8x8xf32>,
    %34 = vector.extract_strided_slice %22 {offsets = [0, 9], sizes = [9, 9], strides = [1, 1]} : vector<9x18xf32> to vector<9x9xf32>
    %35 = vector.extract_strided_slice %34 {offsets = [1, 1], sizes = [8, 8], strides = [1, 1]} : vector<9x9xf32> to vector<8x8xf32>
    %36 = vector.extract_strided_slice %34 {offsets = [0, 0], sizes = [8, 8], strides = [1, 1]} : vector<9x9xf32> to vector<8x8xf32>
    %37 = arith.addf %35, %36 : vector<8x8xf32>
    %38 = vector.extract_strided_slice %34 {offsets = [1, 0], sizes = [8, 8], strides = [1, 1]} : vector<9x9xf32> to vector<8x8xf32>
    %39 = arith.subf %37, %38 : vector<8x8xf32>
    %40 = vector.extract_strided_slice %34 {offsets = [0, 1], sizes = [8, 8], strides = [1, 1]} : vector<9x9xf32> to vector<8x8xf32>
    %41 = arith.subf %39, %40 : vector<8x8xf32>
    %c0_14 = arith.constant 0 : index
    %c1 = arith.constant 1 : index
    %c0_15 = arith.constant 0 : index
    %c0_16 = arith.constant 0 : index
    %42 = vector.load %arg3[%c0_14, %c1, %c0_15, %c0_16] : memref<1x2x8x8xf32, #tpu.memory_space<vmem>>, vector<1x1x8x8xf32>
    %43 = vector.shape_cast %42 : vector<1x1x8x8xf32> to vector<8x8xf32>
    %44 = vector.shape_cast %41 : vector<8x8xf32> to vector<1x1x8x8xf32>
    tpu.vector_store %arg3[%c0_14, %c1, %c0_15, %c0_16], %44 {strides = array<i32>} : memref<1x2x8x8xf32, #tpu.memory_space<vmem>>, vector<1x1x8x8xf32>,
    return
  }
  func.func @transform_0(%arg0: i32) -> (i32, i32, i32) {
    %c0_i32 = arith.constant 0 : i32
    %c0_i32_0 = arith.constant 0 : i32
    %c0_i32_1 = arith.constant 0 : i32
    return %arg0, %c0_i32, %c0_i32_0 : i32, i32, i32
  }
  func.func @transform_1(%arg0: i32) -> (i32, i32) {
    %c0_i32 = arith.constant 0 : i32
    %c0_i32_0 = arith.constant 0 : i32
    %c0_i32_1 = arith.constant 0 : i32
    return %c0_i32, %c0_i32_0 : i32, i32
  }
  func.func @transform_2(%arg0: i32) -> (i32, i32, i32, i32) {
    %c0_i32 = arith.constant 0 : i32
    %c0_i32_0 = arith.constant 0 : i32
    %c0_i32_1 = arith.constant 0 : i32
    %c0_i32_2 = arith.constant 0 : i32
    return %arg0, %c0_i32, %c0_i32_0, %c0_i32_1 : i32, i32, i32, i32
  }
}

</mosaic_0001>

<llo_original>
// kernel: tpu_custom_call.1
$region0: #{tpu_custom_call.1}
  #allocation0 [shape = 'u32[]', space=smem, size = 0x4, offset = 0x4, fixed_abs, tag = 'smem constant byte address 0x4 - core index']
  #allocation1 [shape = 'u32[144,128]{1,0:T(1,128)}', space=vmem, size = 0x12000, scoped, tag = 'internal scratch']
  %s0 = inlined_call_operand.vmem [shape: f32[2,9,4], index: 0, kind: input, shape index: {}]
  %s1 = inlined_call_operand.vmem [shape: f32[18,4], index: 1, kind: input, shape index: {}]
  %s2 = inlined_call_operand.hbm [shape: f32[2,2,8,8], index: 2, kind: output, shape index: {}]
  %s3 = sld [smem:[#allocation0]]
  $region41: #{tpu_custom_call.1} parent=0
    _
  %s5 = ssub.s32 1, %s3
  %s6 = scalar_select 0, %s5, %s3
  $region1: #{tpu_custom_call.1} parent=0
    #allocation2 [shape = 'u8[16384]{0}', space=vmem, size = 0x4000, scoped, tag = 'output window, operand 0']
    #allocation3 [shape = 's32[2]{0}', space=sflag, size = 0x8, scoped, tag = 'scoped memory for tpu_custom_call.1']
    %7 = vsyncpa [#allocation3], 0
    %s8 = scalar_lea.sflag [#allocation3], 1
    %9 = vsyncpa %s8, 0
    loop: start=0, step=1, limit=4
    $region2: #{tpu_custom_call.1} parent=1 // loop_pre_header
      _
    $region3: #{tpu_custom_call.1} parent=1 // loop_header
      %s11 = sphi 0, %s15
      %p12 = scmp.ge.s32.totalorder %s11, 4
      %s21 = sphi 0, %s23
      %s24 = sphi 0, %s21
      %s25 = sphi 0, %s24
      %s41 = sphi 0, %s25
      %s45 = sphi 0, %s45
      %s47 = sphi 0, %s45
      %s48 = sphi 0, %s47
      %s62 = sphi 0, %s48
      %s68 = sphi 0, %s70
      %s71 = sphi 0, %s68
      %s72 = sphi 0, %s71
      %s88 = sphi 0, %s72
    $region4: #{tpu_custom_call.1} parent=1 // loop_header_branch
      %14 = sbr.rel (%p12) target = $region8
    $region5: #{tpu_custom_call.1} parent=1 // loop_body
      %s16 = ssub.s32 %s11, 1
      %s17 = ssub.s32 %s11, 2
      %s18 = sadd.s32 %s11, 1
      %s19 = ssub.s32 %s11, %s18
      %p20 = scmp.eq.s32.totalorder %s19, 0
      %s22 = sadd.s32 %s21, 1
      %s23 = scalar_select %p20, %s21, %s22
      %p26 = pneg %p20
      %p27 = scmp.eq.s32.totalorder %s11, 1
      %p28 = por %p26, %p27
      %p29 = scmp.ne.s32.totalorder %s21, %s24
      %p30 = scmp.eq.s32.totalorder %s11, 0
      %p31 = por %p29, %p30
      %p32 = scmp.ne.s32.totalorder %s21, %s24
      %p33 = scmp.eq.s32.totalorder %s16, 1
      %p34 = por %p32, %p33
      %p35 = scmp.ne.s32.totalorder %s24, %s25
      %p36 = scmp.eq.s32.totalorder %s16, 0
      %p37 = por %p35, %p36
      %p38 = scmp.ne.s32.totalorder %s24, %s25
      %p39 = scmp.eq.s32.totalorder %s17, 1
      %p40 = por %p38, %p39
      %p42 = scmp.ne.s32.totalorder %s25, %s41
      %p43 = scmp.eq.s32.totalorder %s17, 0
      %p44 = por %p42, %p43
      %s46 = sadd.s32 %s45, 1
      %p49 = scmp.eq.s32.totalorder %s11, 1
      %p50 = scmp.ne.s32.totalorder %s45, %s47
      %p51 = scmp.eq.s32.totalorder %s11, 0
      %p52 = por %p50, %p51
      %p53 = scmp.ne.s32.totalorder %s45, %s47
      %p54 = scmp.eq.s32.totalorder %s16, 1
      %p55 = por %p53, %p54
      %p56 = scmp.ne.s32.totalorder %s47, %s48
      %p57 = scmp.eq.s32.totalorder %s16, 0
      %p58 = por %p56, %p57
      %p59 = scmp.ne.s32.totalorder %s47, %s48
      %p60 = scmp.eq.s32.totalorder %s17, 1
      %p61 = por %p59, %p60
      %p63 = scmp.ne.s32.totalorder %s48, %s62
      %p64 = scmp.eq.s32.totalorder %s17, 0
      %p65 = por %p63, %p64
      %s66 = ssub.s32 %s11, %s18
      %p67 = scmp.eq.s32.totalorder %s66, 0
      %s69 = sadd.s32 %s68, 1
      %s70 = scalar_select %p67, %s68, %s69
      %p73 = pneg %p67
      %p74 = scmp.eq.s32.totalorder %s11, 1
      %p75 = por %p73, %p74
      %p76 = scmp.ne.s32.totalorder %s68, %s71
      %p77 = scmp.eq.s32.totalorder %s11, 0
      %p78 = por %p76, %p77
      %p79 = scmp.ne.s32.totalorder %s68, %s71
      %p80 = scmp.eq.s32.totalorder %s16, 1
      %p81 = por %p79, %p80
      %p82 = scmp.ne.s32.totalorder %s71, %s72
      %p83 = scmp.eq.s32.totalorder %s16, 0
      %p84 = por %p82, %p83
      %p85 = scmp.ne.s32.totalorder %s71, %s72
      %p86 = scmp.eq.s32.totalorder %s17, 1
      %p87 = por %p85, %p86
      %p89 = scmp.ne.s32.totalorder %s72, %s88
      %p90 = scmp.eq.s32.totalorder %s17, 0
      %p91 = por %p89, %p90
      %p92 = scmp.le.s32.totalorder 1, %s11
      %p93 = scmp.lt.s32.totalorder %s11, 3
      %p94 = pnand %p92, %p93
      %p95 = pneg %p94
      // Predicated region
      $region9: #{tpu_custom_call.1} parent=5 // pred_check
        _
      $region10: #{tpu_custom_call.1} parent=5 // pred_check_branch
        %97 = sbr.rel (%p94) target = $region12
      $region11: #{tpu_custom_call.1} parent=5 // pred_region
        %s98 = ssub.s32 %s11, 1
        // Predicated region
        $region13: #{tpu_custom_call.1} parent=11 // pred_check
          %p99 = pneg %p58
        $region14: #{tpu_custom_call.1} parent=11 // pred_check_branch
          %101 = sbr.rel (%p99) target = $region16
        $region15: #{tpu_custom_call.1} parent=11 // pred_region
          _
        $region16: #{tpu_custom_call.1} parent=11 // pred_fallthru
          _
      $region12: #{tpu_custom_call.1} parent=5 // pred_fallthru
        _
      %p102 = scmp.lt.s32.totalorder %s11, 2
      // Predicated region
      $region17: #{tpu_custom_call.1} parent=5 // pred_check
        %p103 = pneg %p102
      $region18: #{tpu_custom_call.1} parent=5 // pred_check_branch
        %105 = sbr.rel (%p103) target = $region20
      $region19: #{tpu_custom_call.1} parent=5 // pred_region
        // Predicated region
        $region21: #{tpu_custom_call.1} parent=19 // pred_check
          %p106 = pneg %p31
        $region22: #{tpu_custom_call.1} parent=19 // pred_check_branch
          %108 = sbr.rel (%p106) target = $region24
        $region23: #{tpu_custom_call.1} parent=19 // pred_region
          %p109 = scmp.lt.s32.totalorder %s11, 1
          %s110 = scalar_select %p109, %s11, 1
          %s111 = smul.addr %s110, 2
          %s112 = smul.addr %s111, 8
          %s113 = scalar_lea.vmem %s0, %s112
        $region24: #{tpu_custom_call.1} parent=19 // pred_fallthru
          _
      $region20: #{tpu_custom_call.1} parent=5 // pred_fallthru
        _
      %p114 = scmp.le.s32.totalorder 1, %s11
      %p115 = scmp.lt.s32.totalorder %s11, 3
      %p116 = pnand %p114, %p115
      %p117 = pneg %p116
      // Predicated region
      $region25: #{tpu_custom_call.1} parent=5 // pred_check
        _
      $region26: #{tpu_custom_call.1} parent=5 // pred_check_branch
        %119 = sbr.rel (%p116) target = $region28
      $region27: #{tpu_custom_call.1} parent=5 // pred_region
        %s120 = ssub.s32 %s11, 1
        %p121 = scmp.lt.s32.totalorder %s16, 1
        %s122 = scalar_select %p121, %s16, 1
        %s123 = smul.addr %s122, 2
        %s124 = smul.addr %s123, 8
        %s125 = scalar_lea.vmem %s0, %s124
        %p126 = pneg %p37
        %p127 = pneg %p34
        %p128 = pneg %p58
        %p129 = pneg %p55
        %p130 = pneg %p84
        %p131 = pneg %p81
        %s132 = sand.u32 %s71, 1
        %s133 = scalar_lea.sflag [#allocation3], %s132
        %s134 = sand.u32 %s71, 1
        %s135 = smul.addr %s134, 16
        %s136 = scalar_lea.vmem [#allocation2], %s135
        %p137 = scmp.lt.s32.totalorder %s16, 1
        %s138 = scalar_select %p137, %s16, 1
        %s139 = smul.addr %s138, 2
        %s140 = smul.addr %s139, 8
        %s141 = scalar_lea.vmem %s0, %s140
        %v142 = vld [vmem:[%s141] sm:$0xff]
        %v143 = vld [vmem:[%s141 + $0x8] sm:$0x1]
        %v144 = vld [vmem:[%s1] sm:$0xff]
        %v145 = vld [vmem:[%s1 + $0x8] sm:$0xff]
        %v146 = vld [vmem:[%s1 + $0x10] sm:$0x3]
        %v147 = vmul.f32 %v142, %v142
        %v148 = vmul.f32 %v143, %v143
        %vm149 = vcmask 31744
        %v150 = vsel %vm149, %v147, 0.0
        %151 = vadd.xlane.f32.xlu0 %v150
        %v152 = vpop.xlane.xlu0 %151
        %vm153 = vcmask 24576
        %v154 = vsel %vm153, %v148, 0.0
        %155 = vadd.xlane.f32.xlu0 %v154
        %v156 = vpop.xlane.xlu0 %155
        %v157 = vmul.f32 %v144, %v144
        %v158 = vmul.f32 %v145, %v145
        %v159 = vmul.f32 %v146, %v146
        %v160 = vsel %vm149, %v157, 0.0
        %161 = vadd.xlane.f32.xlu0 %v160
        %v162 = vpop.xlane.xlu0 %161
        %v163 = vsel %vm149, %v158, 0.0
        %164 = vadd.xlane.f32.xlu0 %v163
        %v165 = vpop.xlane.xlu0 %164
        %vm166 = vcmask 25600
        %v167 = vsel %vm166, %v159, 0.0
        %168 = vadd.xlane.f32.xlu0 %v167
        %v169 = vpop.xlane.xlu0 %168
        %v171 = vsel %vm149, %v142, 0
        %v174 = vsel %vm149, %v143, 0
        %v177 = vsel %vm149, %v144, 0
        %v180 = vsel %vm149, %v145, 0
        %v183 = vsel %vm149, %v146, 0
        %185 = vmatprep.subr.mxu0 0.0
        %186 = vmatpush1.xpose.msra.mxu0 0.0
        %187 = vmatprep.subr.mxu0 0.0
        %188 = vmatpush1.xpose.msra.mxu0 0.0
        %189 = vmatprep.subr.mxu0 0.0
        %190 = vmatpush1.xpose.msra.mxu0 0.0
        %191 = vmatprep.subr.mxu0 0.0
        %192 = vmatpush1.xpose.msra.mxu0 0.0
        %193 = vmatprep.subr.mxu0 0.0
        %194 = vmatpush1.xpose.msra.mxu0 0.0
        %195 = vmatprep.subr.mxu0 0.0
        %196 = vmatpush1.xpose.msra.mxu0 0.0
        %197 = vmatprep.subr.mxu0 0.0
        %198 = vmatpush1.xpose.msra.mxu0 0.0
        %199 = vmatprep.subr.mxu0 0.0
        %200 = vmatpush1.xpose.msra.mxu0 0.0
        %201 = vmatprep.subr.mxu0 0.0
        %202 = vmatpush1.xpose.msra.mxu0 0.0
        %203 = vmatprep.subr.mxu0 0.0
        %204 = vmatpush1.xpose.msra.mxu0 0.0
        %205 = vmatprep.subr.mxu0 0.0
        %206 = vmatpush1.xpose.msra.mxu0 0.0
        %207 = vmatprep.subr.mxu0 0.0
        %208 = vmatpush1.xpose.msra.mxu0 0.0
        %209 = vmatprep.subr.mxu0 0.0
        %210 = vmatpush1.xpose.msra.mxu0 0.0
        %211 = vmatprep.subr.mxu0 0.0
        %v212 = vand.u32 %v183, 4294901760
        %213 = vmatpush1.xpose.msra.mxu0 %v212
        %214 = vmatprep.subr.mxu0 0.0
        %v215 = vand.u32 %v180, 4294901760
        %216 = vmatpush1.xpose.msra.mxu0 %v215
        %217 = vmatprep.subr.mxu0 0.0
        %v218 = vand.u32 %v177, 4294901760
        %219 = vmatpush1.xpose.msra.mxu0 %v218
        %220 = vmatprep.subr.mxu0 0.0
        %221 = vmatpush2.xpose.msra.mxu0 0.0
        %222 = vmatprep.subr.mxu0 0.0
        %223 = vmatpush2.xpose.msra.mxu0 0.0
        %224 = vmatprep.subr.mxu0 0.0
        %225 = vmatpush2.xpose.msra.mxu0 0.0
        %226 = vmatprep.subr.mxu0 0.0
        %227 = vmatpush2.xpose.msra.mxu0 0.0
        %228 = vmatprep.subr.mxu0 0.0
        %229 = vmatpush2.xpose.msra.mxu0 0.0
        %230 = vmatprep.subr.mxu0 0.0
        %231 = vmatpush2.xpose.msra.mxu0 0.0
        %232 = vmatprep.subr.mxu0 0.0
        %233 = vmatpush2.xpose.msra.mxu0 0.0
        %234 = vmatprep.subr.mxu0 0.0
        %235 = vmatpush2.xpose.msra.mxu0 0.0
        %236 = vmatprep.subr.mxu0 0.0
        %237 = vmatpush2.xpose.msra.mxu0 0.0
        %238 = vmatprep.subr.mxu0 0.0
        %239 = vmatpush2.xpose.msra.mxu0 0.0
        %240 = vmatprep.subr.mxu0 0.0
        %241 = vmatpush2.xpose.msra.mxu0 0.0
        %242 = vmatprep.subr.mxu0 0.0
        %243 = vmatpush2.xpose.msra.mxu0 0.0
        %244 = vmatprep.subr.mxu0 0.0
        %245 = vmatpush2.xpose.msra.mxu0 0.0
        %246 = vmatprep.subr.mxu0 0.0
        %247 = vmatpush2.xpose.msra.mxu0 0.0
        %248 = vmatprep.subr.mxu0 0.0
        %249 = vmatpush2.xpose.msra.mxu0 0.0
        %250 = vmatprep.subr.mxu0 0.0
        %251 = vmatpush2.xpose.msra.mxu0 0.0
        %252 = vmatprep.mubr.f32.mxu0 0.0
        %v253 = vand.u32 %v171, 4294901760
        %v254 = vsub.f32 %v171, %v253
        %v255 = vand.u32 %v254, 4294901760
        %v256 = vsub.f32 %v254, %v255
        %v257 = vand.u32 %v256, 4294901760
        %258 = vmatmul.mubr.f32.gmra.mxu0 %v257
        %v259 = vpop.f32.mrf.mxu0
        %v260 = vadd.f32 0.0, %v259
        %v261 = vpop.f32.mrf.mxu0
        %262 = vmatprep.mubr.f32.mxu0 0.0
        %v263 = vand.u32 %v174, 4294901760
        %v264 = vsub.f32 %v174, %v263
        %v265 = vand.u32 %v264, 4294901760
        %v266 = vsub.f32 %v264, %v265
        %v267 = vand.u32 %v266, 4294901760
        %268 = vmatmul.mubr.f32.gmra.mxu0 %v267
        %v269 = vpop.f32.mrf.mxu0
        %v270 = vadd.f32 0.0, %v269
        %v271 = vpop.f32.mrf.mxu0
        %272 = vdwg.mxu0
        %273 = vmatprep.subr.mxu0 0.0
        %274 = vmatpush1.xpose.msra.mxu0 0.0
        %275 = vmatprep.subr.mxu0 0.0
        %276 = vmatpush1.xpose.msra.mxu0 0.0
        %277 = vmatprep.subr.mxu0 0.0
        %278 = vmatpush1.xpose.msra.mxu0 0.0
        %279 = vmatprep.subr.mxu0 0.0
        %280 = vmatpush1.xpose.msra.mxu0 0.0
        %281 = vmatprep.subr.mxu0 0.0
        %282 = vmatpush1.xpose.msra.mxu0 0.0
        %283 = vmatprep.subr.mxu0 0.0
        %284 = vmatpush1.xpose.msra.mxu0 0.0
        %285 = vmatprep.subr.mxu0 0.0
        %286 = vmatpush1.xpose.msra.mxu0 0.0
        %287 = vmatprep.subr.mxu0 0.0
        %288 = vmatpush1.xpose.msra.mxu0 0.0
        %289 = vmatprep.subr.mxu0 0.0
        %290 = vmatpush1.xpose.msra.mxu0 0.0
        %291 = vmatprep.subr.mxu0 0.0
        %292 = vmatpush1.xpose.msra.mxu0 0.0
        %293 = vmatprep.subr.mxu0 0.0
        %294 = vmatpush1.xpose.msra.mxu0 0.0
        %295 = vmatprep.subr.mxu0 0.0
        %296 = vmatpush1.xpose.msra.mxu0 0.0
        %297 = vmatprep.subr.mxu0 0.0
        %298 = vmatpush1.xpose.msra.mxu0 0.0
        %299 = vmatprep.subr.mxu0 0.0
        %v300 = vand.u32 %v183, 4294901760
        %v301 = vsub.f32 %v183, %v300
        %v302 = vand.u32 %v301, 4294901760
        %v303 = vsub.f32 %v301, %v302
        %v304 = vand.u32 %v303, 4294901760
        %305 = vmatpush1.xpose.msra.mxu0 %v304
        %306 = vmatprep.subr.mxu0 0.0
        %v307 = vand.u32 %v180, 4294901760
        %v308 = vsub.f32 %v180, %v307
        %v309 = vand.u32 %v308, 4294901760
        %v310 = vsub.f32 %v308, %v309
        %v311 = vand.u32 %v310, 4294901760
        %312 = vmatpush1.xpose.msra.mxu0 %v311
        %313 = vmatprep.subr.mxu0 0.0
        %v314 = vand.u32 %v177, 4294901760
        %v315 = vsub.f32 %v177, %v314
        %v316 = vand.u32 %v315, 4294901760
        %v317 = vsub.f32 %v315, %v316
        %v318 = vand.u32 %v317, 4294901760
        %319 = vmatpush1.xpose.msra.mxu0 %v318
        %320 = vmatprep.subr.mxu0 0.0
        %321 = vmatpush2.xpose.msra.mxu0 0.0
        %322 = vmatprep.subr.mxu0 0.0
        %323 = vmatpush2.xpose.msra.mxu0 0.0
        %324 = vmatprep.subr.mxu0 0.0
        %325 = vmatpush2.xpose.msra.mxu0 0.0
        %326 = vmatprep.subr.mxu0 0.0
        %327 = vmatpush2.xpose.msra.mxu0 0.0
        %328 = vmatprep.subr.mxu0 0.0
        %329 = vmatpush2.xpose.msra.mxu0 0.0
        %330 = vmatprep.subr.mxu0 0.0
        %331 = vmatpush2.xpose.msra.mxu0 0.0
        %332 = vmatprep.subr.mxu0 0.0
        %333 = vmatpush2.xpose.msra.mxu0 0.0
        %334 = vmatprep.subr.mxu0 0.0
        %335 = vmatpush2.xpose.msra.mxu0 0.0
        %336 = vmatprep.subr.mxu0 0.0
        %337 = vmatpush2.xpose.msra.mxu0 0.0
        %338 = vmatprep.subr.mxu0 0.0
        %339 = vmatpush2.xpose.msra.mxu0 0.0
        %340 = vmatprep.subr.mxu0 0.0
        %341 = vmatpush2.xpose.msra.mxu0 0.0
        %342 = vmatprep.subr.mxu0 0.0
        %343 = vmatpush2.xpose.msra.mxu0 0.0
        %344 = vmatprep.subr.mxu0 0.0
        %345 = vmatpush2.xpose.msra.mxu0 0.0
        %346 = vmatprep.subr.mxu0 0.0
        %347 = vmatpush2.xpose.msra.mxu0 0.0
        %348 = vmatprep.subr.mxu0 0.0
        %349 = vmatpush2.xpose.msra.mxu0 0.0
        %350 = vmatprep.subr.mxu0 0.0
        %351 = vmatpush2.xpose.msra.mxu0 0.0
        %352 = vmatprep.mubr.f32.mxu0 0.0
        %v353 = vand.u32 %v171, 4294901760
        %354 = vmatmul.mubr.f32.gmra.mxu0 %v353
        %v355 = vpop.f32.mrf.mxu0
        %v356 = vadd.f32 %v260, %v355
        %v357 = vpop.f32.mrf.mxu0
        %358 = vmatprep.mubr.f32.mxu0 0.0
        %v359 = vand.u32 %v174, 4294901760
        %360 = vmatmul.mubr.f32.gmra.mxu0 %v359
        %v361 = vpop.f32.mrf.mxu0
        %v362 = vadd.f32 %v270, %v361
        %v363 = vpop.f32.mrf.mxu0
        %364 = vdwg.mxu0
        %365 = vmatprep.subr.mxu0 0.0
        %366 = vmatpush1.xpose.msra.mxu0 0.0
        %367 = vmatprep.subr.mxu0 0.0
        %368 = vmatpush1.xpose.msra.mxu0 0.0
        %369 = vmatprep.subr.mxu0 0.0
        %370 = vmatpush1.xpose.msra.mxu0 0.0
        %371 = vmatprep.subr.mxu0 0.0
        %372 = vmatpush1.xpose.msra.mxu0 0.0
        %373 = vmatprep.subr.mxu0 0.0
        %374 = vmatpush1.xpose.msra.mxu0 0.0
        %375 = vmatprep.subr.mxu0 0.0
        %376 = vmatpush1.xpose.msra.mxu0 0.0
        %377 = vmatprep.subr.mxu0 0.0
        %378 = vmatpush1.xpose.msra.mxu0 0.0
        %379 = vmatprep.subr.mxu0 0.0
        %380 = vmatpush1.xpose.msra.mxu0 0.0
        %381 = vmatprep.subr.mxu0 0.0
        %382 = vmatpush1.xpose.msra.mxu0 0.0
        %383 = vmatprep.subr.mxu0 0.0
        %384 = vmatpush1.xpose.msra.mxu0 0.0
        %385 = vmatprep.subr.mxu0 0.0
        %386 = vmatpush1.xpose.msra.mxu0 0.0
        %387 = vmatprep.subr.mxu0 0.0
        %388 = vmatpush1.xpose.msra.mxu0 0.0
        %389 = vmatprep.subr.mxu0 0.0
        %390 = vmatpush1.xpose.msra.mxu0 0.0
        %391 = vmatprep.subr.mxu0 0.0
        %v392 = vand.u32 %v183, 4294901760
        %v393 = vsub.f32 %v183, %v392
        %394 = vmatpush1.xpose.msra.mxu0 %v393
        %395 = vmatprep.subr.mxu0 0.0
        %v396 = vand.u32 %v180, 4294901760
        %v397 = vsub.f32 %v180, %v396
        %398 = vmatpush1.xpose.msra.mxu0 %v397
        %399 = vmatprep.subr.mxu0 0.0
        %v400 = vand.u32 %v177, 4294901760
        %v401 = vsub.f32 %v177, %v400
        %402 = vmatpush1.xpose.msra.mxu0 %v401
        %403 = vmatprep.subr.mxu0 0.0
        %404 = vmatpush2.xpose.msra.mxu0 0.0
        %405 = vmatprep.subr.mxu0 0.0
        %406 = vmatpush2.xpose.msra.mxu0 0.0
        %407 = vmatprep.subr.mxu0 0.0
        %408 = vmatpush2.xpose.msra.mxu0 0.0
        %409 = vmatprep.subr.mxu0 0.0
        %410 = vmatpush2.xpose.msra.mxu0 0.0
        %411 = vmatprep.subr.mxu0 0.0
        %412 = vmatpush2.xpose.msra.mxu0 0.0
        %413 = vmatprep.subr.mxu0 0.0
        %414 = vmatpush2.xpose.msra.mxu0 0.0
        %415 = vmatprep.subr.mxu0 0.0
        %416 = vmatpush2.xpose.msra.mxu0 0.0
        %417 = vmatprep.subr.mxu0 0.0
        %418 = vmatpush2.xpose.msra.mxu0 0.0
        %419 = vmatprep.subr.mxu0 0.0
        %420 = vmatpush2.xpose.msra.mxu0 0.0
        %421 = vmatprep.subr.mxu0 0.0
        %422 = vmatpush2.xpose.msra.mxu0 0.0
        %423 = vmatprep.subr.mxu0 0.0
        %424 = vmatpush2.xpose.msra.mxu0 0.0
        %425 = vmatprep.subr.mxu0 0.0
        %426 = vmatpush2.xpose.msra.mxu0 0.0
        %427 = vmatprep.subr.mxu0 0.0
        %428 = vmatpush2.xpose.msra.mxu0 0.0
        %429 = vmatprep.subr.mxu0 0.0
        %430 = vmatpush2.xpose.msra.mxu0 0.0
        %431 = vmatprep.subr.mxu0 0.0
        %432 = vmatpush2.xpose.msra.mxu0 0.0
        %433 = vmatprep.subr.mxu0 0.0
        %434 = vmatpush2.xpose.msra.mxu0 0.0
        %435 = vmatprep.mubr.f32.mxu0 0.0
        %v436 = vand.u32 %v171, 4294901760
        %v437 = vsub.f32 %v171, %v436
        %438 = vmatmul.mubr.f32.gmra.mxu0 %v437
        %v439 = vpop.f32.mrf.mxu0
        %v440 = vadd.f32 %v356, %v439
        %v441 = vpop.f32.mrf.mxu0
        %442 = vmatprep.mubr.f32.mxu0 0.0
        %v443 = vand.u32 %v174, 4294901760
        %v444 = vsub.f32 %v174, %v443
        %445 = vmatmul.mubr.f32.gmra.mxu0 %v444
        %v446 = vpop.f32.mrf.mxu0
        %v447 = vadd.f32 %v362, %v446
        %v448 = vpop.f32.mrf.mxu0
        %449 = vdwg.mxu0
        %450 = vmatprep.subr.mxu0 0.0
        %451 = vmatpush1.xpose.msra.mxu0 0.0
        %452 = vmatprep.subr.mxu0 0.0
        %453 = vmatpush1.xpose.msra.mxu0 0.0
        %454 = vmatprep.subr.mxu0 0.0
        %455 = vmatpush1.xpose.msra.mxu0 0.0
        %456 = vmatprep.subr.mxu0 0.0
        %457 = vmatpush1.xpose.msra.mxu0 0.0
        %458 = vmatprep.subr.mxu0 0.0
        %459 = vmatpush1.xpose.msra.mxu0 0.0
        %460 = vmatprep.subr.mxu0 0.0
        %461 = vmatpush1.xpose.msra.mxu0 0.0
        %462 = vmatprep.subr.mxu0 0.0
        %463 = vmatpush1.xpose.msra.mxu0 0.0
        %464 = vmatprep.subr.mxu0 0.0
        %465 = vmatpush1.xpose.msra.mxu0 0.0
        %466 = vmatprep.subr.mxu0 0.0
        %467 = vmatpush1.xpose.msra.mxu0 0.0
        %468 = vmatprep.subr.mxu0 0.0
        %469 = vmatpush1.xpose.msra.mxu0 0.0
        %470 = vmatprep.subr.mxu0 0.0
        %471 = vmatpush1.xpose.msra.mxu0 0.0
        %472 = vmatprep.subr.mxu0 0.0
        %473 = vmatpush1.xpose.msra.mxu0 0.0
        %474 = vmatprep.subr.mxu0 0.0
        %475 = vmatpush1.xpose.msra.mxu0 0.0
        %476 = vmatprep.subr.mxu0 0.0
        %v477 = vand.u32 %v183, 4294901760
        %478 = vmatpush1.xpose.msra.mxu0 %v477
        %479 = vmatprep.subr.mxu0 0.0
        %v480 = vand.u32 %v180, 4294901760
        %481 = vmatpush1.xpose.msra.mxu0 %v480
        %482 = vmatprep.subr.mxu0 0.0
        %v483 = vand.u32 %v177, 4294901760
        %484 = vmatpush1.xpose.msra.mxu0 %v483
        %485 = vmatprep.subr.mxu0 0.0
        %486 = vmatpush2.xpose.msra.mxu0 0.0
        %487 = vmatprep.subr.mxu0 0.0
        %488 = vmatpush2.xpose.msra.mxu0 0.0
        %489 = vmatprep.subr.mxu0 0.0
        %490 = vmatpush2.xpose.msra.mxu0 0.0
        %491 = vmatprep.subr.mxu0 0.0
        %492 = vmatpush2.xpose.msra.mxu0 0.0
        %493 = vmatprep.subr.mxu0 0.0
        %494 = vmatpush2.xpose.msra.mxu0 0.0
        %495 = vmatprep.subr.mxu0 0.0
        %496 = vmatpush2.xpose.msra.mxu0 0.0
        %497 = vmatprep.subr.mxu0 0.0
        %498 = vmatpush2.xpose.msra.mxu0 0.0
        %499 = vmatprep.subr.mxu0 0.0
        %500 = vmatpush2.xpose.msra.mxu0 0.0
        %501 = vmatprep.subr.mxu0 0.0
        %502 = vmatpush2.xpose.msra.mxu0 0.0
        %503 = vmatprep.subr.mxu0 0.0
        %504 = vmatpush2.xpose.msra.mxu0 0.0
        %505 = vmatprep.subr.mxu0 0.0
        %506 = vmatpush2.xpose.msra.mxu0 0.0
        %507 = vmatprep.subr.mxu0 0.0
        %508 = vmatpush2.xpose.msra.mxu0 0.0
        %509 = vmatprep.subr.mxu0 0.0
        %510 = vmatpush2.xpose.msra.mxu0 0.0
        %511 = vmatprep.subr.mxu0 0.0
        %512 = vmatpush2.xpose.msra.mxu0 0.0
        %513 = vmatprep.subr.mxu0 0.0
        %514 = vmatpush2.xpose.msra.mxu0 0.0
        %515 = vmatprep.subr.mxu0 0.0
        %516 = vmatpush2.xpose.msra.mxu0 0.0
        %517 = vmatprep.mubr.f32.mxu0 0.0
        %v518 = vand.u32 %v171, 4294901760
        %v519 = vsub.f32 %v171, %v518
        %v520 = vand.u32 %v519, 4294901760
        %521 = vmatmul.mubr.f32.gmra.mxu0 %v520
        %v522 = vpop.f32.mrf.mxu0
        %v523 = vadd.f32 %v440, %v522
        %v524 = vpop.f32.mrf.mxu0
        %525 = vmatprep.mubr.f32.mxu0 0.0
        %v526 = vand.u32 %v174, 4294901760
        %v527 = vsub.f32 %v174, %v526
        %v528 = vand.u32 %v527, 4294901760
        %529 = vmatmul.mubr.f32.gmra.mxu0 %v528
        %v530 = vpop.f32.mrf.mxu0
        %v531 = vadd.f32 %v447, %v530
        %v532 = vpop.f32.mrf.mxu0
        %533 = vdwg.mxu0
        %534 = vmatprep.subr.mxu0 0.0
        %535 = vmatpush1.xpose.msra.mxu0 0.0
        %536 = vmatprep.subr.mxu0 0.0
        %537 = vmatpush1.xpose.msra.mxu0 0.0
        %538 = vmatprep.subr.mxu0 0.0
        %539 = vmatpush1.xpose.msra.mxu0 0.0
        %540 = vmatprep.subr.mxu0 0.0
        %541 = vmatpush1.xpose.msra.mxu0 0.0
        %542 = vmatprep.subr.mxu0 0.0
        %543 = vmatpush1.xpose.msra.mxu0 0.0
        %544 = vmatprep.subr.mxu0 0.0
        %545 = vmatpush1.xpose.msra.mxu0 0.0
        %546 = vmatprep.subr.mxu0 0.0
        %547 = vmatpush1.xpose.msra.mxu0 0.0
        %548 = vmatprep.subr.mxu0 0.0
        %549 = vmatpush1.xpose.msra.mxu0 0.0
        %550 = vmatprep.subr.mxu0 0.0
        %551 = vmatpush1.xpose.msra.mxu0 0.0
        %552 = vmatprep.subr.mxu0 0.0
        %553 = vmatpush1.xpose.msra.mxu0 0.0
        %554 = vmatprep.subr.mxu0 0.0
        %555 = vmatpush1.xpose.msra.mxu0 0.0
        %556 = vmatprep.subr.mxu0 0.0
        %557 = vmatpush1.xpose.msra.mxu0 0.0
        %558 = vmatprep.subr.mxu0 0.0
        %559 = vmatpush1.xpose.msra.mxu0 0.0
        %560 = vmatprep.subr.mxu0 0.0
        %v561 = vand.u32 %v183, 4294901760
        %v562 = vsub.f32 %v183, %v561
        %v563 = vand.u32 %v562, 4294901760
        %564 = vmatpush1.xpose.msra.mxu0 %v563
        %565 = vmatprep.subr.mxu0 0.0
        %v566 = vand.u32 %v180, 4294901760
        %v567 = vsub.f32 %v180, %v566
        %v568 = vand.u32 %v567, 4294901760
        %569 = vmatpush1.xpose.msra.mxu0 %v568
        %570 = vmatprep.subr.mxu0 0.0
        %v571 = vand.u32 %v177, 4294901760
        %v572 = vsub.f32 %v177, %v571
        %v573 = vand.u32 %v572, 4294901760
        %574 = vmatpush1.xpose.msra.mxu0 %v573
        %575 = vmatprep.subr.mxu0 0.0
        %576 = vmatpush2.xpose.msra.mxu0 0.0
        %577 = vmatprep.subr.mxu0 0.0
        %578 = vmatpush2.xpose.msra.mxu0 0.0
        %579 = vmatprep.subr.mxu0 0.0
        %580 = vmatpush2.xpose.msra.mxu0 0.0
        %581 = vmatprep.subr.mxu0 0.0
        %582 = vmatpush2.xpose.msra.mxu0 0.0
        %583 = vmatprep.subr.mxu0 0.0
        %584 = vmatpush2.xpose.msra.mxu0 0.0
        %585 = vmatprep.subr.mxu0 0.0
        %586 = vmatpush2.xpose.msra.mxu0 0.0
        %587 = vmatprep.subr.mxu0 0.0
        %588 = vmatpush2.xpose.msra.mxu0 0.0
        %589 = vmatprep.subr.mxu0 0.0
        %590 = vmatpush2.xpose.msra.mxu0 0.0
        %591 = vmatprep.subr.mxu0 0.0
        %592 = vmatpush2.xpose.msra.mxu0 0.0
        %593 = vmatprep.subr.mxu0 0.0
        %594 = vmatpush2.xpose.msra.mxu0 0.0
        %595 = vmatprep.subr.mxu0 0.0
        %596 = vmatpush2.xpose.msra.mxu0 0.0
        %597 = vmatprep.subr.mxu0 0.0
        %598 = vmatpush2.xpose.msra.mxu0 0.0
        %599 = vmatprep.subr.mxu0 0.0
        %600 = vmatpush2.xpose.msra.mxu0 0.0
        %601 = vmatprep.subr.mxu0 0.0
        %602 = vmatpush2.xpose.msra.mxu0 0.0
        %603 = vmatprep.subr.mxu0 0.0
        %604 = vmatpush2.xpose.msra.mxu0 0.0
        %605 = vmatprep.subr.mxu0 0.0
        %606 = vmatpush2.xpose.msra.mxu0 0.0
        %607 = vmatprep.mubr.f32.mxu0 0.0
        %v608 = vand.u32 %v171, 4294901760
        %609 = vmatmul.mubr.f32.gmra.mxu0 %v608
        %v610 = vpop.f32.mrf.mxu0
        %v611 = vadd.f32 %v523, %v610
        %v612 = vpop.f32.mrf.mxu0
        %613 = vmatprep.mubr.f32.mxu0 0.0
        %v614 = vand.u32 %v174, 4294901760
        %615 = vmatmul.mubr.f32.gmra.mxu0 %v614
        %v616 = vpop.f32.mrf.mxu0
        %v617 = vadd.f32 %v531, %v616
        %v618 = vpop.f32.mrf.mxu0
        %619 = vdwg.mxu0
        %620 = vmatprep.subr.mxu0 0.0
        %621 = vmatpush1.xpose.msra.mxu0 0.0
        %622 = vmatprep.subr.mxu0 0.0
        %623 = vmatpush1.xpose.msra.mxu0 0.0
        %624 = vmatprep.subr.mxu0 0.0
        %625 = vmatpush1.xpose.msra.mxu0 0.0
        %626 = vmatprep.subr.mxu0 0.0
        %627 = vmatpush1.xpose.msra.mxu0 0.0
        %628 = vmatprep.subr.mxu0 0.0
        %629 = vmatpush1.xpose.msra.mxu0 0.0
        %630 = vmatprep.subr.mxu0 0.0
        %631 = vmatpush1.xpose.msra.mxu0 0.0
        %632 = vmatprep.subr.mxu0 0.0
        %633 = vmatpush1.xpose.msra.mxu0 0.0
        %634 = vmatprep.subr.mxu0 0.0
        %635 = vmatpush1.xpose.msra.mxu0 0.0
        %636 = vmatprep.subr.mxu0 0.0
        %637 = vmatpush1.xpose.msra.mxu0 0.0
        %638 = vmatprep.subr.mxu0 0.0
        %639 = vmatpush1.xpose.msra.mxu0 0.0
        %640 = vmatprep.subr.mxu0 0.0
        %641 = vmatpush1.xpose.msra.mxu0 0.0
        %642 = vmatprep.subr.mxu0 0.0
        %643 = vmatpush1.xpose.msra.mxu0 0.0
        %644 = vmatprep.subr.mxu0 0.0
        %645 = vmatpush1.xpose.msra.mxu0 0.0
        %646 = vmatprep.subr.mxu0 0.0
        %v647 = vand.u32 %v183, 4294901760
        %648 = vmatpush1.xpose.msra.mxu0 %v647
        %649 = vmatprep.subr.mxu0 0.0
        %v650 = vand.u32 %v180, 4294901760
        %651 = vmatpush1.xpose.msra.mxu0 %v650
        %652 = vmatprep.subr.mxu0 0.0
        %v653 = vand.u32 %v177, 4294901760
        %654 = vmatpush1.xpose.msra.mxu0 %v653
        %655 = vmatprep.subr.mxu0 0.0
        %656 = vmatpush2.xpose.msra.mxu0 0.0
        %657 = vmatprep.subr.mxu0 0.0
        %658 = vmatpush2.xpose.msra.mxu0 0.0
        %659 = vmatprep.subr.mxu0 0.0
        %660 = vmatpush2.xpose.msra.mxu0 0.0
        %661 = vmatprep.subr.mxu0 0.0
        %662 = vmatpush2.xpose.msra.mxu0 0.0
        %663 = vmatprep.subr.mxu0 0.0
        %664 = vmatpush2.xpose.msra.mxu0 0.0
        %665 = vmatprep.subr.mxu0 0.0
        %666 = vmatpush2.xpose.msra.mxu0 0.0
        %667 = vmatprep.subr.mxu0 0.0
        %668 = vmatpush2.xpose.msra.mxu0 0.0
        %669 = vmatprep.subr.mxu0 0.0
        %670 = vmatpush2.xpose.msra.mxu0 0.0
        %671 = vmatprep.subr.mxu0 0.0
        %672 = vmatpush2.xpose.msra.mxu0 0.0
        %673 = vmatprep.subr.mxu0 0.0
        %674 = vmatpush2.xpose.msra.mxu0 0.0
        %675 = vmatprep.subr.mxu0 0.0
        %676 = vmatpush2.xpose.msra.mxu0 0.0
        %677 = vmatprep.subr.mxu0 0.0
        %678 = vmatpush2.xpose.msra.mxu0 0.0
        %679 = vmatprep.subr.mxu0 0.0
        %680 = vmatpush2.xpose.msra.mxu0 0.0
        %681 = vmatprep.subr.mxu0 0.0
        %682 = vmatpush2.xpose.msra.mxu0 0.0
        %683 = vmatprep.subr.mxu0 0.0
        %684 = vmatpush2.xpose.msra.mxu0 0.0
        %685 = vmatprep.subr.mxu0 0.0
        %686 = vmatpush2.xpose.msra.mxu0 0.0
        %687 = vmatprep.mubr.f32.mxu0 0.0
        %v688 = vand.u32 %v171, 4294901760
        %689 = vmatmul.mubr.f32.gmra.mxu0 %v688
        %v690 = vpop.f32.mrf.mxu0
        %v691 = vadd.f32 %v611, %v690
        %v692 = vpop.f32.mrf.mxu0
        %693 = vmatprep.mubr.f32.mxu0 0.0
        %v694 = vand.u32 %v174, 4294901760
        %695 = vmatmul.mubr.f32.gmra.mxu0 %v694
        %v696 = vpop.f32.mrf.mxu0
        %v697 = vadd.f32 %v617, %v696
        %v698 = vpop.f32.mrf.mxu0
        %699 = vdwg.mxu0
        %v703 = vlaneseq
        %v704 = vand.u32 %v703, 127
        %v705 = vlaneseq
        %v706 = vshrl.u32 %v705, 7
        %v707 = vsub.s32 %v704, %v706
        %v708 = vrot.slane %v162, %v707
        %v709 = vadd.s32 %v704, 4294967288
        %v710 = vlaneseq
        %v711 = vshrl.u32 %v710, 7
        %v712 = vsub.s32 %v709, %v711
        %v713 = vrot.slane %v165, %v712
        %vm714 = vcmask 130112
        %v715 = vsel %vm714, %v713, %v708
        %v716 = vadd.s32 %v704, 4294967280
        %v717 = vlaneseq
        %v718 = vshrl.u32 %v717, 7
        %v719 = vsub.s32 %v716, %v718
        %v720 = vrot.slane %v169, %v719
        %vm721 = vcmask 195712
        %v722 = vsel %vm721, %v720, %v715
        %vm723 = vcmask 1042434
        %v724 = vsel %vm723, %v722, %v722
        %vm725 = vcmask 1043459
        %v726 = vsel %vm725, %v722, %v724
        %vm727 = vcmask 1044484
        %v728 = vsel %vm727, %v722, %v726
        %vm729 = vcmask 1045509
        %v730 = vsel %vm729, %v722, %v728
        %vm731 = vcmask 1046534
        %v732 = vsel %vm731, %v722, %v730
        %vm733 = vcmask 1047559
        %v734 = vsel %vm733, %v722, %v732
        %v737 = vadd.f32 %v152, %v734
        %v738 = vadd.f32 %v156, %v722
        %v739 = vmul.f32 %v691, 2.0
        %v740 = vmul.f32 %v697, 2.0
        %v741 = vsub.f32 %v737, %v739
        %v742 = vsub.f32 %v738, %v740
        %v743 = vmax.f32 %v741, 0.0
        %v744 = vmax.f32 %v742, 0.0
        %v745 = vsub.f32 0.0, %v743
        %v746 = vsub.f32 0.0, %v744
        %v747 = vmul.f32 %v745, 1.442695
        %v748 = vpow.pop %v747
        %v749 = vmul.f32 %v746, 1.442695
        %v750 = vpow.pop %v749
        %v752 = vrot.slane %v748, 7
        %753 = vrot.lane.b32.xlu0 %v752, 1
        %v754 = vpop.permute.xlu0 %753
        %v756 = vadd.f32 %v748, %v754
        %v757 = vadd.f32 %v750, %v754
        %759 = vrot.lane.b32.xlu0 %v748, 1
        %v760 = vpop.permute.xlu0 %759
        %761 = vrot.lane.b32.xlu0 %v750, 1
        %v762 = vpop.permute.xlu0 %761
        %v765 = vsub.f32 %v756, %v760
        %v766 = vsub.f32 %v757, %v762
        %v768 = vsub.f32 %v765, %v752
        %v769 = vsub.f32 %v766, %v752
        %772 = vrot.lane.b32.xlu0 %v768, 127
        %v773 = vpop.permute.xlu0 %772
        %774 = vrot.lane.b32.xlu0 %v769, 127
        %v775 = vpop.permute.xlu0 %774
        %vm778 = vcmask 64513
        %779 = vst.msk [vmem:[%s136 - $0x1] sm:$0xfe] %vm778, %v773
        %vm780 = vcmask 57344
        %781 = vst.msk [vmem:[%s136 + $0x7] sm:$0x1] %vm780, %v775
        %782 = vrot.lane.b32.xlu0 %v768, 118
        %v783 = vpop.permute.xlu0 %782
        %784 = vrot.lane.b32.xlu0 %v769, 118
        %v785 = vpop.permute.xlu0 %784
        %s788 = scalar_lea.vmem %s136, 8 [#allocation2]
        %789 = vst.msk [vmem:[%s788 - $0x1] sm:$0xfe] %vm778, %v783
        %790 = vst.msk [vmem:[%s788 + $0x7] sm:$0x1] %vm780, %v785
        %s791 = sand.u32 %s71, 1
        %s792 = scalar_lea.sflag [#allocation3], %s791
        %s793 = sand.u32 %s71, 1
        %s794 = smul.addr %s793, 16
        %s795 = scalar_lea.vmem [#allocation2], %s794
        // Predicated region
        $region29: #{tpu_custom_call.1} parent=27 // pred_check
          %p796 = pneg %p81
        $region30: #{tpu_custom_call.1} parent=27 // pred_check_branch
          %798 = sbr.rel (%p796) target = $region32
        $region31: #{tpu_custom_call.1} parent=27 // pred_region
          %s800 = ssub.s32 256, 256
          %801 = vsyncadd %s792, %s800
          %s802 = smul.addr %s16, 2
          %s803 = smul.addr %s802, 128
          %s804 = scalar_lea.hbm %s2, %s803
          %s805 = sshll.u32 %s795, 4
          %s806 = int_to_ptr.vmem [resolvable:$true] %s805
          %811 = dma.vmem_to_hbm [thread:$0]  %s806, 256, %s804, %s792, 128, 128, 8
        $region32: #{tpu_custom_call.1} parent=27 // pred_fallthru
          _
      $region28: #{tpu_custom_call.1} parent=5 // pred_fallthru
        _
      %p812 = scmp.le.s32.totalorder 2, %s11
      // Predicated region
      $region33: #{tpu_custom_call.1} parent=5 // pred_check
        %p813 = pneg %p812
      $region34: #{tpu_custom_call.1} parent=5 // pred_check_branch
        %815 = sbr.rel (%p813) target = $region36
      $region35: #{tpu_custom_call.1} parent=5 // pred_region
        %s816 = ssub.s32 %s11, 2
        // Predicated region
        $region37: #{tpu_custom_call.1} parent=35 // pred_check
          %p817 = pneg %p87
        $region38: #{tpu_custom_call.1} parent=35 // pred_check_branch
          %819 = sbr.rel (%p817) target = $region40
        $region39: #{tpu_custom_call.1} parent=35 // pred_region
          %s820 = sand.u32 %s72, 1
          %s821 = scalar_lea.sflag [#allocation3], %s820
          %s822 = sand.u32 %s72, 1
          %s823 = smul.addr %s822, 16
          %s824 = scalar_lea.vmem [#allocation2], %s823
          %825 = dma.done %s821, 256
        $region40: #{tpu_custom_call.1} parent=35 // pred_fallthru
          _
      $region36: #{tpu_custom_call.1} parent=5 // pred_fallthru
        _
    $region6: #{tpu_custom_call.1} parent=1 // loop_footer
      %s15 = sadd.s32 1, %s11
    $region7: #{tpu_custom_call.1} parent=1 // loop_footer_branch
      %10 = sbr.rel target = $region3
    $region8: #{tpu_custom_call.1} parent=1 // loop_exit
      _
    %826 = vsyncpa [#allocation3], 1
    %s827 = scalar_lea.sflag [#allocation3], 1
    %828 = vsyncpa %s827, 1

</llo_original>
